<compile_context>
chip_gen: v7x
topology: tpu7x:2x2x1
jax: 0.10.0
libtpu: 0.0.40
codegen_flags: <defaults>
</compile_context>

<pallas_src>
import math
import jax
import jax.numpy as jnp
from jax.experimental import pallas as pl
from jax.experimental.pallas import tpu as pltpu


def _gelu_tanh(x):
    # PyTorch nn.GELU(approximate='tanh'):
    # 0.5 * x * (1 + tanh(sqrt(2/pi) * (x + 0.044715 * x^3)))
    c = math.sqrt(2.0 / math.pi)
    return 0.5 * x * (1.0 + jnp.tanh(c * (x + 0.044715 * x * x * x)))


def _round_up(n, m):
    return ((n + m - 1) // m) * m


def _pick_hidden_tile(h_dim, th):
    """Largest multiple of 128 that divides H and is <= th (else whole H)."""
    if h_dim <= th:
        return h_dim
    t = (th // 128) * 128
    while t >= 128:
        if h_dim % t == 0:
            return t
        t -= 128
    return h_dim


def mlp_kernel(x_ref, w1_ref, b1_ref, w2_ref, b2_ref, o_ref, acc_ref):
    # Grid = (M_pad // tm, H // th); axis 1 (hidden chunks) is the reduction.
    # x_ref:  (tm, C)   compute-dtype activation tile (constant across k)
    # w1_ref: (C, th)   c_fc weight column tile
    # b1_ref: (1, th)   c_fc bias chunk (f32)
    # w2_ref: (th, C)   c_proj weight row tile
    # b2_ref: (1, C)    c_proj bias (f32)
    # o_ref:  (tm, C)   output tile
    # acc_ref:(tm, C)   f32 accumulator scratch
    k = pl.program_id(1)

    @pl.when(k == 0)
    def _():
        acc_ref[...] = jnp.zeros_like(acc_ref)

    # c_fc on this hidden chunk: MXU matmul (bf16 in, f32 accumulate).
    h = jnp.dot(x_ref[...], w1_ref[...], preferred_element_type=jnp.float32)
    h = h + b1_ref[...]          # f32 bias add
    g = _gelu_tanh(h)            # f32 GELU (VPU/EUP)

    # c_proj partial product, accumulated in f32.
    acc_ref[...] += jnp.dot(g.astype(w2_ref.dtype), w2_ref[...],
                            preferred_element_type=jnp.float32)

    @pl.when(k == pl.num_programs(1) - 1)
    def _():
        o_ref[...] = (acc_ref[...] + b2_ref[...]).astype(o_ref.dtype)


def mlp_forward(x, w1, b1, w2, b2, *, tm=256, th=512,
                compute_dtype=jnp.bfloat16):
    """x: (B, T, C). w1: (C, 4C), b1: (4C,), w2: (4C, C), b2: (C,).

    Weights are stored transposed vs. PyTorch (in_features, out_features) so
    the kernel computes y = gelu(x @ w1 + b1) @ w2 + b2 directly on the MXU.
    """
    B, T, C = x.shape
    H = w1.shape[1]
    M = B * T
    out_dtype = x.dtype

    # Row tile: as large as requested but never beyond (sublane-padded) M.
    tm_eff = min(tm, _round_up(M, 8))
    M_pad = _round_up(M, tm_eff)
    # Hidden-dim streaming tile.
    th_eff = _pick_hidden_tile(H, th)

    cbytes = jnp.dtype(compute_dtype).itemsize
    obytes = jnp.dtype(out_dtype).itemsize

    x2d = x.reshape(M, C).astype(compute_dtype)
    if M_pad != M:
        x2d = jnp.pad(x2d, ((0, M_pad - M), (0, 0)))
    w1c = w1.astype(compute_dtype)
    w2c = w2.astype(compute_dtype)
    b1_2d = b1.reshape(1, H).astype(jnp.float32)
    b2_2d = b2.reshape(1, C).astype(jnp.float32)

    grid_m = M_pad // tm_eff
    grid_h = H // th_eff

    # VMEM budget: double-buffered streamed tiles + accumulator + f32 temps.
    needed = (2 * tm_eff * C * cbytes          # x tile
              + 2 * C * th_eff * cbytes        # w1 tile
              + 2 * th_eff * 4                 # b1 chunk
              + 2 * th_eff * C * cbytes        # w2 tile
              + C * 4                          # b2
              + 2 * tm_eff * C * obytes        # out tile
              + tm_eff * C * 4                 # f32 accumulator
              + 3 * tm_eff * th_eff * 4)       # h / gelu intermediates
    vmem_limit = int(min(max(2 * needed, 32 * 1024 * 1024), 64 * 1024 * 1024))

    cost = pl.CostEstimate(
        flops=4 * M_pad * C * H,                       # two matmuls
        transcendentals=M_pad * H,                     # tanh per hidden elem
        bytes_accessed=(M_pad * C * (cbytes + obytes)  # x in, y out
                        + grid_m * 2 * C * H * cbytes  # w1 + w2 per row tile
                        + grid_m * (H + C) * 4),       # biases
    )

    out = pl.pallas_call(
        mlp_kernel,
        out_shape=jax.ShapeDtypeStruct((M_pad, C), out_dtype),
        grid_spec=pltpu.PrefetchScalarGridSpec(
            num_scalar_prefetch=0,
            grid=(grid_m, grid_h),
            in_specs=[
                pl.BlockSpec((tm_eff, C), lambda i, k: (i, 0)),   # x tile
                pl.BlockSpec((C, th_eff), lambda i, k: (0, k)),   # w1 col tile
                pl.BlockSpec((1, th_eff), lambda i, k: (0, k)),   # b1 chunk
                pl.BlockSpec((th_eff, C), lambda i, k: (k, 0)),   # w2 row tile
                pl.BlockSpec((1, C), lambda i, k: (0, 0)),        # b2
            ],
            out_specs=pl.BlockSpec((tm_eff, C), lambda i, k: (i, 0)),
            scratch_shapes=[pltpu.VMEM((tm_eff, C), jnp.float32)],
        ),
        compiler_params=pltpu.CompilerParams(
            dimension_semantics=("parallel", "arbitrary"),
            vmem_limit_bytes=vmem_limit,
        ),
        cost_estimate=cost,
    )(x2d, w1c, b1_2d, w2c, b2_2d)

    return out[:M].reshape(B, T, C)


def init_params(key, n_embd):
    """Deterministic init matching nn.Linear shapes (stored transposed)."""
    h = 4 * n_embd
    k1, k2, k3, k4 = jax.random.split(key, 4)
    # torch Linear default: U(-1/sqrt(fan_in), 1/sqrt(fan_in))
    s1 = 1.0 / math.sqrt(n_embd)
    s2 = 1.0 / math.sqrt(h)
    w1 = jax.random.uniform(k1, (n_embd, h), jnp.float32, -s1, s1)   # c_fc.weight.T
    b1 = jax.random.uniform(k2, (h,), jnp.float32, -s1, s1)          # c_fc.bias
    w2 = jax.random.uniform(k3, (h, n_embd), jnp.float32, -s2, s2)   # c_proj.weight.T
    b2 = jax.random.uniform(k4, (n_embd,), jnp.float32, -s2, s2)     # c_proj.bias
    return w1, b1, w2, b2


if __name__ == "__main__":
    B, T, n_embd = 2, 8, 32

    key = jax.random.PRNGKey(0)
    kx, kp = jax.random.split(key)
    x = jax.random.normal(kx, (B, T, n_embd), dtype=jnp.float32)
    w1, b1, w2, b2 = init_params(kp, n_embd)

    out = mlp_forward(x, w1, b1, w2, b2)
    out = jax.block_until_ready(out)
    assert out.shape == (B, T, n_embd)

    # Reference 1: same precision recipe (bf16 matmul inputs, f32 accumulate).
    xc = x.reshape(B * T, n_embd).astype(jnp.bfloat16)
    w1c = w1.astype(jnp.bfloat16)
    w2c = w2.astype(jnp.bfloat16)
    h_ref = jnp.dot(xc, w1c, preferred_element_type=jnp.float32) + b1
    g_ref = _gelu_tanh(h_ref)
    ref_bf16 = (jnp.dot(g_ref.astype(jnp.bfloat16), w2c,
                        preferred_element_type=jnp.float32) + b2)
    ref_bf16 = ref_bf16.astype(x.dtype).reshape(B, T, n_embd)
    assert jnp.allclose(out, ref_bf16, atol=1e-3, rtol=1e-3)

    # Reference 2: full-f32 math (looser tolerance covers bf16 quantization).
    h32 = x.reshape(B * T, n_embd) @ w1 + b1
    ref_f32 = (_gelu_tanh(h32) @ w2 + b2).reshape(B, T, n_embd)
    assert jnp.allclose(out, ref_f32, atol=3e-2, rtol=3e-2)

    print("KERNEL_OK")
</pallas_src>

<mosaic_0001>
module attributes {stable_mosaic.version = 11 : i64} {
  func.func @mlp_kernel(%arg0: i32, %arg1: i32, %arg2: memref<16x32xbf16, #tpu.memory_space<vmem>>, %arg3: memref<32x128xbf16, #tpu.memory_space<vmem>>, %arg4: memref<1x128xf32, #tpu.memory_space<vmem>>, %arg5: memref<128x32xbf16, #tpu.memory_space<vmem>>, %arg6: memref<1x32xf32, #tpu.memory_space<vmem>>, %arg7: memref<16x32xf32, #tpu.memory_space<vmem>>, %arg8: memref<16x32xf32, #tpu.memory_space<vmem>>) attributes {dimension_semantics = [#tpu.dimension_semantics<parallel>, #tpu.dimension_semantics<arbitrary>], iteration_bounds = array<i64: 1, 1>, scalar_prefetch = 0 : i64, scratch_operands = 1 : i64, tpu.core_type = #tpu.core_type<tc>, window_params = [{transform_indices = @transform_0, window_bounds = array<i64: 16, 32>}, {transform_indices = @transform_1, window_bounds = array<i64: 32, 128>}, {transform_indices = @transform_2, window_bounds = array<i64: 1, 128>}, {transform_indices = @transform_3, window_bounds = array<i64: 128, 32>}, {pipeline_mode = #tpu.pipeline_mode<synchronous>, transform_indices = @transform_4, window_bounds = array<i64: 1, 32>}, {transform_indices = @transform_5, window_bounds = array<i64: 16, 32>}]} {
    %c0_i32 = arith.constant 0 : i32
    %0 = arith.cmpi eq, %arg1, %c0_i32 : i32
    %1 = arith.extui %0 : i1 to i32
    %c0_i32_0 = arith.constant 0 : i32
    %2 = arith.cmpi ne, %1, %c0_i32_0 : i32
    scf.if %2 {
      %cst_19 = arith.constant 0.000000e+00 : f32
      %31 = vector.broadcast %cst_19 : f32 to vector<16x32xf32>
      %c0_20 = arith.constant 0 : index
      %c0_21 = arith.constant 0 : index
      %32 = vector.load %arg8[%c0_20, %c0_21] : memref<16x32xf32, #tpu.memory_space<vmem>>, vector<16x32xf32>
      tpu.vector_store %arg8[%c0_20, %c0_21], %31 {strides = array<i32>} : memref<16x32xf32, #tpu.memory_space<vmem>>, vector<16x32xf32>,
    } else {
    }
    %c0 = arith.constant 0 : index
    %c0_1 = arith.constant 0 : index
    %3 = vector.load %arg2[%c0, %c0_1] : memref<16x32xbf16, #tpu.memory_space<vmem>>, vector<16x32xbf16>
    %c0_2 = arith.constant 0 : index
    %c0_3 = arith.constant 0 : index
    %4 = vector.load %arg3[%c0_2, %c0_3] : memref<32x128xbf16, #tpu.memory_space<vmem>>, vector<32x128xbf16>
    %cst = arith.constant dense<0.000000e+00> : vector<16x128xf32>
    %5 = tpu.matmul %3, %4, %cst {dimension_numbers = #tpu.dot_dimension_numbers<[1], [0], [0], [1], [0, 0, 1, 1], [], []>} : vector<16x32xbf16>, vector<32x128xbf16>, vector<16x128xf32> -> vector<16x128xf32>
    %c0_4 = arith.constant 0 : index
    %c0_5 = arith.constant 0 : index
    %6 = vector.load %arg4[%c0_4, %c0_5] : memref<1x128xf32, #tpu.memory_space<vmem>>, vector<1x128xf32>
    %7 = vector.broadcast %6 : vector<1x128xf32> to vector<16x128xf32>
    %8 = arith.addf %5, %7 : vector<16x128xf32>
    %cst_6 = arith.constant 5.000000e-01 : f32
    %9 = vector.broadcast %cst_6 : f32 to vector<16x128xf32>
    %10 = arith.mulf %9, %8 : vector<16x128xf32>
    %cst_7 = arith.constant 4.471500e-02 : f32
    %11 = vector.broadcast %cst_7 : f32 to vector<16x128xf32>
    %12 = arith.mulf %11, %8 : vector<16x128xf32>
    %13 = arith.mulf %12, %8 : vector<16x128xf32>
    %14 = arith.mulf %13, %8 : vector<16x128xf32>
    %15 = arith.addf %8, %14 : vector<16x128xf32>
    %cst_8 = arith.constant 0.797884583 : f32
    %16 = vector.broadcast %cst_8 : f32 to vector<16x128xf32>
    %17 = arith.mulf %16, %15 : vector<16x128xf32>
    %18 = math.tanh %17 : vector<16x128xf32>
    %cst_9 = arith.constant 1.000000e+00 : f32
    %19 = vector.broadcast %cst_9 : f32 to vector<16x128xf32>
    %20 = arith.addf %19, %18 : vector<16x128xf32>
    %21 = arith.mulf %10, %20 : vector<16x128xf32>
    %c0_10 = arith.constant 0 : index
    %c0_11 = arith.constant 0 : index
    %22 = vector.load %arg8[%c0_10, %c0_11] : memref<16x32xf32, #tpu.memory_space<vmem>>, vector<16x32xf32>
    %23 = arith.truncf %21 : vector<16x128xf32> to vector<16x128xbf16>
    %c0_12 = arith.constant 0 : index
    %c0_13 = arith.constant 0 : index
    %24 = vector.load %arg5[%c0_12, %c0_13] : memref<128x32xbf16, #tpu.memory_space<vmem>>, vector<128x32xbf16>
    %cst_14 = arith.constant dense<0.000000e+00> : vector<16x32xf32>
    %25 = tpu.matmul %23, %24, %cst_14 {dimension_numbers = #tpu.dot_dimension_numbers<[1], [0], [0], [1], [0, 0, 1, 1], [], []>} : vector<16x128xbf16>, vector<128x32xbf16>, vector<16x32xf32> -> vector<16x32xf32>
    %26 = arith.addf %22, %25 : vector<16x32xf32>
    %c0_15 = arith.constant 0 : index
    %c0_16 = arith.constant 0 : index
    %27 = vector.load %arg8[%c0_15, %c0_16] : memref<16x32xf32, #tpu.memory_space<vmem>>, vector<16x32xf32>
    tpu.vector_store %arg8[%c0_15, %c0_16], %26 {strides = array<i32>} : memref<16x32xf32, #tpu.memory_space<vmem>>, vector<16x32xf32>,
    %c0_i32_17 = arith.constant 0 : i32
    %28 = arith.cmpi eq, %arg1, %c0_i32_17 : i32
    %29 = arith.extui %28 : i1 to i32
    %c0_i32_18 = arith.constant 0 : i32
    %30 = arith.cmpi ne, %29, %c0_i32_18 : i32
    scf.if %30 {
      %c0_19 = arith.constant 0 : index
      %c0_20 = arith.constant 0 : index
      %31 = vector.load %arg8[%c0_19, %c0_20] : memref<16x32xf32, #tpu.memory_space<vmem>>, vector<16x32xf32>
      %c0_21 = arith.constant 0 : index
      %c0_22 = arith.constant 0 : index
      %32 = vector.load %arg6[%c0_21, %c0_22] : memref<1x32xf32, #tpu.memory_space<vmem>>, vector<1x32xf32>
      %33 = vector.broadcast %32 : vector<1x32xf32> to vector<16x32xf32>
      %34 = arith.addf %31, %33 : vector<16x32xf32>
      %c0_23 = arith.constant 0 : index
      %c0_24 = arith.constant 0 : index
      %35 = vector.load %arg7[%c0_23, %c0_24] : memref<16x32xf32, #tpu.memory_space<vmem>>, vector<16x32xf32>
      tpu.vector_store %arg7[%c0_23, %c0_24], %34 {strides = array<i32>} : memref<16x32xf32, #tpu.memory_space<vmem>>, vector<16x32xf32>,
    } else {
    }
    return
  }
  func.func @transform_0(%arg0: i32, %arg1: i32) -> (i32, i32) {
    %c0_i32 = arith.constant 0 : i32
    %c0_i32_0 = arith.constant 0 : i32
    return %arg0, %c0_i32 : i32, i32
  }
  func.func @transform_1(%arg0: i32, %arg1: i32) -> (i32, i32) {
    %c0_i32 = arith.constant 0 : i32
    %c0_i32_0 = arith.constant 0 : i32
    return %c0_i32, %arg1 : i32, i32
  }
  func.func @transform_2(%arg0: i32, %arg1: i32) -> (i32, i32) {
    %c0_i32 = arith.constant 0 : i32
    %c0_i32_0 = arith.constant 0 : i32
    return %c0_i32, %arg1 : i32, i32
  }
  func.func @transform_3(%arg0: i32, %arg1: i32) -> (i32, i32) {
    %c0_i32 = arith.constant 0 : i32
    %c0_i32_0 = arith.constant 0 : i32
    return %arg1, %c0_i32 : i32, i32
  }
  func.func @transform_4(%arg0: i32, %arg1: i32) -> (i32, i32) {
    %c0_i32 = arith.constant 0 : i32
    %c0_i32_0 = arith.constant 0 : i32
    %c0_i32_1 = arith.constant 0 : i32
    return %c0_i32, %c0_i32_0 : i32, i32
  }
  func.func @transform_5(%arg0: i32, %arg1: i32) -> (i32, i32) {
    %c0_i32 = arith.constant 0 : i32
    %c0_i32_0 = arith.constant 0 : i32
    return %arg0, %c0_i32 : i32, i32
  }
}

</mosaic_0001>

<llo_original>
// kernel: tpu_custom_call.1
$region0: #{tpu_custom_call.1}
  #allocation0 [shape = 'u32[]', space=smem, size = 0x4, offset = 0x4, fixed_abs, tag = 'smem constant byte address 0x4 - core index']
  #allocation1 [shape = 'u32[144,128]{1,0:T(1,128)}', space=vmem, size = 0x12000, scoped, tag = 'internal scratch']
  #allocation2 [shape = 'f32[16,32]{1,0:T(8,128)}', space=vmem, size = 0x2000, scoped, tag = 'scratch operand']
  %s0 = inlined_call_operand.vmem [shape: bf16[16,32], index: 0, kind: input, shape index: {}]
  %s1 = inlined_call_operand.vmem [shape: bf16[32,128], index: 1, kind: input, shape index: {}]
  %s2 = inlined_call_operand.vmem [shape: f32[1,128], index: 2, kind: input, shape index: {}]
  %s3 = inlined_call_operand.vmem [shape: bf16[128,32], index: 3, kind: input, shape index: {}]
  %s4 = inlined_call_operand.vmem [shape: f32[1,32], index: 4, kind: input, shape index: {}]
  %s5 = inlined_call_operand.hbm [shape: f32[16,32], index: 5, kind: output, shape index: {}]
  %s6 = sld [smem:[#allocation0]]
  $region38: #{tpu_custom_call.1} parent=0
    _
  %s8 = ssub.s32 1, %s6
  %s9 = scalar_select 0, %s8, %s6
  $region1: #{tpu_custom_call.1} parent=0
    #allocation3 [shape = 'u8[8192]{0}', space=vmem, size = 0x2000, scoped, tag = 'output window, operand 0, single buffered']
    #allocation4 [shape = 's32[1]{0}', space=sflag, size = 0x4, scoped, tag = 'scoped memory for tpu_custom_call.1']
    %10 = vsyncpa [#allocation4], 0
    // Predicated region
    $region2: #{tpu_custom_call.1} parent=1 // pred_check
      _
    $region3: #{tpu_custom_call.1} parent=1 // pred_check_branch
      %12 = sbr.rel (0) target = $region5
    $region4: #{tpu_custom_call.1} parent=1 // pred_region
      _
    $region5: #{tpu_custom_call.1} parent=1 // pred_fallthru
      _
    // Predicated region
    $region6: #{tpu_custom_call.1} parent=1 // pred_check
      _
    $region7: #{tpu_custom_call.1} parent=1 // pred_check_branch
      %14 = sbr.rel (0) target = $region9
    $region8: #{tpu_custom_call.1} parent=1 // pred_region
      _
    $region9: #{tpu_custom_call.1} parent=1 // pred_fallthru
      _
    // Predicated region
    $region10: #{tpu_custom_call.1} parent=1 // pred_check
      _
    $region11: #{tpu_custom_call.1} parent=1 // pred_check_branch
      %16 = sbr.rel (0) target = $region13
    $region12: #{tpu_custom_call.1} parent=1 // pred_region
      _
    $region13: #{tpu_custom_call.1} parent=1 // pred_fallthru
      _
    // Predicated region
    $region14: #{tpu_custom_call.1} parent=1 // pred_check
      _
    $region15: #{tpu_custom_call.1} parent=1 // pred_check_branch
      %18 = sbr.rel (0) target = $region17
    $region16: #{tpu_custom_call.1} parent=1 // pred_region
      _
    $region17: #{tpu_custom_call.1} parent=1 // pred_fallthru
      _
    // Predicated region
    $region18: #{tpu_custom_call.1} parent=1 // pred_check
      _
    $region19: #{tpu_custom_call.1} parent=1 // pred_check_branch
      %20 = sbr.rel (0) target = $region21
    $region20: #{tpu_custom_call.1} parent=1 // pred_region
      _
    $region21: #{tpu_custom_call.1} parent=1 // pred_fallthru
      _
    %p22 = scmp.eq.s32.totalorder 0, 0
    // Predicated region
    $region22: #{tpu_custom_call.1} parent=1 // pred_check
      %p23 = pneg %p22
    $region23: #{tpu_custom_call.1} parent=1 // pred_check_branch
      %25 = sbr.rel (%p23) target = $region25
    $region24: #{tpu_custom_call.1} parent=1 // pred_region
      %vm26 = vcmask 261120
      %27 = vst.msk [vmem:[#allocation2] sm:$0xff] %vm26, 0.0
      %28 = vst.msk [vmem:[#allocation2 + $0x8] sm:$0xff] %vm26, 0.0
    $region25: #{tpu_custom_call.1} parent=1 // pred_fallthru
      _
    %v29 = vld [vmem:[%s0] sm:$0xf]
    %v30 = vld [vmem:[%s0 + $0x4] sm:$0xf]
    %v31 = vld [vmem:[%s1] sm:$0xf]
    %v32 = vld [vmem:[%s1 + $0x4] sm:$0xf]
    %v33 = vld [vmem:[%s1 + $0x8] sm:$0xf]
    %v34 = vld [vmem:[%s1 + $0xc] sm:$0xf]
    %v35 = vld [vmem:[%s2] sm:$0x1]
    %v37 = vlaneseq
    %v38 = vshrl.u32 %v37, 7
    %v39 = vsub.s32 0, %v38
    %v40 = vrot.slane %v35, %v39
    %v44 = vunpack.c.l.b16 %v29
    %v45 = vunpack.c.l.b16 %v30
    %v46 = vpack.c.b16 %v45, %v44
    %v51 = vunpack.c.l.b16 %v31
    %v52 = vunpack.c.l.b16 %v32
    %v53 = vunpack.c.l.b16 %v33
    %v54 = vunpack.c.l.b16 %v34
    %v55 = vpack.c.b16 %v52, %v51
    %v56 = vpack.c.b16 %v54, %v53
    %vm59 = vcmask 261120
    %v61 = vsel %vm59, %v46, 0
    %63 = vmatprep.subr.bf16.mxu0 0
    %64 = vmatpush1.bf16.msra.mxu0 %v55
    %65 = vmatprep.subr.bf16.mxu0 0
    %66 = vmatpush1.bf16.msra.mxu0 %v56
    %67 = vmatprep.subr.bf16.mxu0 0
    %68 = vmatpush1.bf16.msra.mxu0 0
    %69 = vmatprep.subr.bf16.mxu0 0
    %70 = vmatpush1.bf16.msra.mxu0 0
    %71 = vmatprep.subr.bf16.mxu0 0
    %72 = vmatpush1.bf16.msra.mxu0 0
    %73 = vmatprep.subr.bf16.mxu0 0
    %74 = vmatpush1.bf16.msra.mxu0 0
    %75 = vmatprep.subr.bf16.mxu0 0
    %76 = vmatpush1.bf16.msra.mxu0 0
    %77 = vmatprep.subr.bf16.mxu0 0
    %78 = vmatpush1.bf16.msra.mxu0 0
    %79 = vmatprep.subr.bf16.mxu0 0
    %80 = vmatpush1.bf16.msra.mxu0 0
    %81 = vmatprep.subr.bf16.mxu0 0
    %82 = vmatpush1.bf16.msra.mxu0 0
    %83 = vmatprep.subr.bf16.mxu0 0
    %84 = vmatpush1.bf16.msra.mxu0 0
    %85 = vmatprep.subr.bf16.mxu0 0
    %86 = vmatpush1.bf16.msra.mxu0 0
    %87 = vmatprep.subr.bf16.mxu0 0
    %88 = vmatpush1.bf16.msra.mxu0 0
    %89 = vmatprep.subr.bf16.mxu0 0
    %90 = vmatpush1.bf16.msra.mxu0 0
    %91 = vmatprep.subr.bf16.mxu0 0
    %92 = vmatpush1.bf16.msra.mxu0 0
    %93 = vmatprep.subr.bf16.mxu0 0
    %94 = vmatpush1.bf16.msra.mxu0 0
    %95 = vmatprep.mubr.bf16.mxu0 0
    %96 = vmatmul.mubr.bf16.gmra.mrb[0].mxu0 %v61
    %v97 = vpop.f32.mrb[0].mxu0
    %v98 = vadd.f32 %v40, %v97
    %v99 = vpop.f32.mrb[0].mxu0
    %v100 = vpop.f32.mrb[0].mxu0
    %v101 = vadd.f32 %v40, %v100
    %v102 = vpop.f32.mrb[0].mxu0
    %103 = vdwg.mxu0
    %v104 = vmul.f32 %v98, 0.5
    %v105 = vmul.f32 %v101, 0.5
    %v106 = vmul.f32 %v98, 0.044715
    %v107 = vmul.f32 %v101, 0.044715
    %v108 = vmul.f32 %v106, %v98
    %v109 = vmul.f32 %v107, %v101
    %v110 = vmul.f32 %v108, %v98
    %v111 = vmul.f32 %v109, %v101
    %v112 = vadd.f32 %v98, %v110
    %v113 = vadd.f32 %v101, %v111
    %v114 = vmul.f32 %v112, 0.7978846
    %v115 = vmul.f32 %v113, 0.7978846
    %v116 = vtanh.pop %v114
    %v117 = vtanh.pop %v115
    %v118 = vadd.f32 %v116, 1.0
    %v119 = vadd.f32 %v117, 1.0
    %v120 = vmul.f32 %v104, %v118
    %v121 = vmul.f32 %v105, %v119
    %v122 = vld [vmem:[#allocation2] sm:$0xff]
    %v123 = vld [vmem:[#allocation2 + $0x8] sm:$0xff]
    %v124 = vpack.c.bf16 %v121, %v120
    %v125 = vld [vmem:[%s3] sm:$0xf]
    %v126 = vld [vmem:[%s3 + $0x4] sm:$0xf]
    %v127 = vld [vmem:[%s3 + $0x8] sm:$0xf]
    %v128 = vld [vmem:[%s3 + $0xc] sm:$0xf]
    %v129 = vld [vmem:[%s3 + $0x10] sm:$0xf]
    %v130 = vld [vmem:[%s3 + $0x14] sm:$0xf]
    %v131 = vld [vmem:[%s3 + $0x18] sm:$0xf]
    %v132 = vld [vmem:[%s3 + $0x1c] sm:$0xf]
    %v133 = vld [vmem:[%s3 + $0x20] sm:$0xf]
    %v134 = vld [vmem:[%s3 + $0x24] sm:$0xf]
    %v135 = vld [vmem:[%s3 + $0x28] sm:$0xf]
    %v136 = vld [vmem:[%s3 + $0x2c] sm:$0xf]
    %v137 = vld [vmem:[%s3 + $0x30] sm:$0xf]
    %v138 = vld [vmem:[%s3 + $0x34] sm:$0xf]
    %v139 = vld [vmem:[%s3 + $0x38] sm:$0xf]
    %v140 = vld [vmem:[%s3 + $0x3c] sm:$0xf]
    %v157 = vunpack.c.l.b16 %v125
    %v158 = vunpack.c.l.b16 %v126
    %v159 = vunpack.c.l.b16 %v127
    %v160 = vunpack.c.l.b16 %v128
    %v161 = vunpack.c.l.b16 %v129
    %v162 = vunpack.c.l.b16 %v130
    %v163 = vunpack.c.l.b16 %v131
    %v164 = vunpack.c.l.b16 %v132
    %v165 = vunpack.c.l.b16 %v133
    %v166 = vunpack.c.l.b16 %v134
    %v167 = vunpack.c.l.b16 %v135
    %v168 = vunpack.c.l.b16 %v136
    %v169 = vunpack.c.l.b16 %v137
    %v170 = vunpack.c.l.b16 %v138
    %v171 = vunpack.c.l.b16 %v139
    %v172 = vunpack.c.l.b16 %v140
    %v173 = vpack.c.b16 %v158, %v157
    %v174 = vpack.c.b16 %v160, %v159
    %v175 = vpack.c.b16 %v162, %v161
    %v176 = vpack.c.b16 %v164, %v163
    %v177 = vpack.c.b16 %v166, %v165
    %v178 = vpack.c.b16 %v168, %v167
    %v179 = vpack.c.b16 %v170, %v169
    %v180 = vpack.c.b16 %v172, %v171
    %189 = vmatprep.subr.bf16.mxu0 0
    %190 = vmatpush1.bf16.msra.mxu0 %v173
    %191 = vmatprep.subr.bf16.mxu0 0
    %192 = vmatpush1.bf16.msra.mxu0 %v174
    %193 = vmatprep.subr.bf16.mxu0 0
    %194 = vmatpush1.bf16.msra.mxu0 %v175
    %195 = vmatprep.subr.bf16.mxu0 0
    %196 = vmatpush1.bf16.msra.mxu0 %v176
    %197 = vmatprep.subr.bf16.mxu0 0
    %198 = vmatpush1.bf16.msra.mxu0 %v177
    %199 = vmatprep.subr.bf16.mxu0 0
    %200 = vmatpush1.bf16.msra.mxu0 %v178
    %201 = vmatprep.subr.bf16.mxu0 0
    %202 = vmatpush1.bf16.msra.mxu0 %v179
    %203 = vmatprep.subr.bf16.mxu0 0
    %204 = vmatpush1.bf16.msra.mxu0 %v180
    %205 = vmatprep.subr.bf16.mxu0 0
    %206 = vmatpush1.bf16.msra.mxu0 0
    %207 = vmatprep.subr.bf16.mxu0 0
    %208 = vmatpush1.bf16.msra.mxu0 0
    %209 = vmatprep.subr.bf16.mxu0 0
    %210 = vmatpush1.bf16.msra.mxu0 0
    %211 = vmatprep.subr.bf16.mxu0 0
    %212 = vmatpush1.bf16.msra.mxu0 0
    %213 = vmatprep.subr.bf16.mxu0 0
    %214 = vmatpush1.bf16.msra.mxu0 0
    %215 = vmatprep.subr.bf16.mxu0 0
    %216 = vmatpush1.bf16.msra.mxu0 0
    %217 = vmatprep.subr.bf16.mxu0 0
    %218 = vmatpush1.bf16.msra.mxu0 0
    %219 = vmatprep.subr.bf16.mxu0 0
    %220 = vmatpush1.bf16.msra.mxu0 0
    %221 = vmatprep.mubr.bf16.mxu0 0
    %222 = vmatmul.mubr.bf16.gmra.mrb[0].mxu0 %v124
    %v223 = vpop.f32.mrb[0].mxu0
    %v224 = vadd.f32 0.0, %v223
    %v225 = vpop.f32.mrb[0].mxu0
    %v226 = vpop.f32.mrb[0].mxu0
    %v227 = vadd.f32 0.0, %v226
    %v228 = vpop.f32.mrb[0].mxu0
    %229 = vdwg.mxu0
    %v230 = vadd.f32 %v122, %v224
    %v231 = vadd.f32 %v123, %v227
    %232 = vst.msk [vmem:[#allocation2] sm:$0xff] %vm59, %v230
    %233 = vst.msk [vmem:[#allocation2 + $0x8] sm:$0xff] %vm59, %v231
    // Predicated region
    $region26: #{tpu_custom_call.1} parent=1 // pred_check
      %p234 = pneg %p22
    $region27: #{tpu_custom_call.1} parent=1 // pred_check_branch
      %236 = sbr.rel (%p234) target = $region29
    $region28: #{tpu_custom_call.1} parent=1 // pred_region
      %v237 = vld [vmem:[#allocation2] sm:$0xff]
      %v238 = vld [vmem:[#allocation2 + $0x8] sm:$0xff]
      %v239 = vld [vmem:[%s4] sm:$0x1]
      %v241 = vlaneseq
      %v242 = vshrl.u32 %v241, 7
      %v243 = vsub.s32 0, %v242
      %v244 = vrot.slane %v239, %v243
      %v246 = vadd.f32 %v237, %v244
      %v247 = vadd.f32 %v238, %v244
      %248 = vst.msk [vmem:[#allocation3] sm:$0xff] %vm59, %v246
      %249 = vst.msk [vmem:[#allocation3 + $0x8] sm:$0xff] %vm59, %v247
    $region29: #{tpu_custom_call.1} parent=1 // pred_fallthru
      _
    // Predicated region
    $region30: #{tpu_custom_call.1} parent=1 // pred_check
      _
    $region31: #{tpu_custom_call.1} parent=1 // pred_check_branch
      %251 = sbr.rel (0) target = $region33
    $region32: #{tpu_custom_call.1} parent=1 // pred_region
      %s253 = ssub.s32 256, 256
      %254 = vsyncadd [#allocation4], %s253
      %s255 = sshll.u32 [#allocation3], 4
      %s256 = int_to_ptr.vmem [resolvable:$true] %s255
      %261 = dma.vmem_to_hbm [thread:$0]  %s256, 256, %s5, [#allocation4], 128, 128, 8
    $region33: #{tpu_custom_call.1} parent=1 // pred_fallthru
      _
    // Predicated region
    $region34: #{tpu_custom_call.1} parent=1 // pred_check
      _
    $region35: #{tpu_custom_call.1} parent=1 // pred_check_branch
      %263 = sbr.rel (0) target = $region37
    $region36: #{tpu_custom_call.1} parent=1 // pred_region
      %264 = dma.done [#allocation4], 256
    $region37: #{tpu_custom_call.1} parent=1 // pred_fallthru
      _
    %265 = vsyncpa [#allocation4], 1

</llo_original>
